<compile_context>
chip_gen: v6e
topology: v6e:2x2x1
jax: 0.10.0
libtpu: 0.0.40
codegen_flags: <defaults>
</compile_context>

<pallas_src>
import jax
import jax.numpy as jnp
from jax.experimental import pallas as pl
from jax.experimental.pallas import tpu as pltpu

LATENT_DIM = 2
N_CLASSES = 10
N_CLS_PAD = 16                      # label-table rows padded to a sublane multiple
IMG_FEATURES = 28 * 28              # 784
IN_FEATURES = IMG_FEATURES + N_CLASSES  # 794 (PyTorch layer-1 fan-in)
HIDDEN = 256
OUT_PAD = 128                       # lane-dense padded output width
MAX_TB = 512                        # max batch tile (mem-bound: bigger tile = fewer steps)


def _round_up(n, m):
    return ((n + m - 1) // m) * m


def _cdiv(a, b):
    return (a + b - 1) // b


def _mlp_encoder_kernel(x_ref, y_ref, w1_ref, tbl_ref, w2_ref, b2_ref, z_ref):
    # Layer 1, image part: f32 tile cast to bf16 in-vreg, MXU dot with f32 acc.
    x = x_ref[...].astype(jnp.bfloat16)                       # (tb, 784) bf16
    h = jnp.dot(x, w1_ref[...], preferred_element_type=jnp.float32)   # (tb, 256) f32

    # Layer 1, label part: one_hot(y, 16) @ (w1[784:794] + b1) built in-kernel.
    lbl = y_ref[...]                                          # (tb, 1) int32
    cls = jax.lax.broadcasted_iota(jnp.int32, (lbl.shape[0], N_CLS_PAD), 1)
    onehot = (lbl == cls).astype(jnp.float32)                 # (tb, 16) exact 0/1
    yb = jnp.dot(onehot, tbl_ref[...], preferred_element_type=jnp.float32)  # (tb, 256)

    h = jnp.maximum(h + yb, 0.0)

    # Layer 2: (tb, 256)bf16 @ (256, 128)bf16 -> f32 + b2; columns >= LATENT_DIM
    # are zero padding, sliced off in the wrapper (lane-dense store stays fast).
    z = jnp.dot(h.astype(w2_ref.dtype), w2_ref[...],
                preferred_element_type=jnp.float32)
    z_ref[...] = z + b2_ref[...]


def mlp_encoder_forward(x, y, params):
    """x: (B, 1, 28, 28) float32 NCHW; y: (B,) int labels. Returns (B, LATENT_DIM)."""
    B = x.shape[0]
    w1, b1, w2, b2 = params          # w1: (794, 256), b1: (256,), w2: (256, 2), b2: (2,)

    # ---- Wrapper-side prep: only free views + tiny weight reshuffles --------
    x2d = x.reshape(B, IMG_FEATURES)                  # free reshape, stays f32
    y2d = y.reshape(B, 1).astype(jnp.int32)           # (B, 1) int32 label column

    w1x = w1[:IMG_FEATURES].astype(jnp.bfloat16)      # (784, 256) bf16, resident
    # Label table: one-hot(y) @ table == w1[784+y] + b1 (b1 folded in, exact per row).
    tbl = jnp.pad(w1[IMG_FEATURES:] + b1[None, :],
                  ((0, N_CLS_PAD - N_CLASSES), (0, 0)))        # (16, 256) f32
    w2p = jnp.pad(w2, ((0, 0), (0, OUT_PAD - LATENT_DIM))).astype(jnp.bfloat16)
    b2p = jnp.pad(b2, (0, OUT_PAD - LATENT_DIM)).reshape(1, OUT_PAD).astype(jnp.float32)

    # ---- Batch tile / grid ---------------------------------------------------
    tb = min(MAX_TB, _round_up(B, 8))
    # Aim for >= 2 grid steps so the "parallel" axis can use both v7x TensorCores.
    if B > 8 and _cdiv(B, tb) < 2:
        tb = max(8, _round_up(_cdiv(B, 2), 8))
    n_blk = _cdiv(B, tb)            # last block may be partial; Pallas clamps DMAs

    out = pl.pallas_call(
        _mlp_encoder_kernel,
        out_shape=jax.ShapeDtypeStruct((n_blk * tb, OUT_PAD), jnp.float32),
        grid_spec=pltpu.PrefetchScalarGridSpec(
            num_scalar_prefetch=0,
            grid=(n_blk,),
            in_specs=[
                pl.BlockSpec((tb, IMG_FEATURES), lambda i: (i, 0)),      # x (f32 stream)
                pl.BlockSpec((tb, 1), lambda i: (i, 0)),                 # labels (int32)
                pl.BlockSpec((IMG_FEATURES, HIDDEN), lambda i: (0, 0)),  # w1 (resident)
                pl.BlockSpec((N_CLS_PAD, HIDDEN), lambda i: (0, 0)),     # label table
                pl.BlockSpec((HIDDEN, OUT_PAD), lambda i: (0, 0)),       # w2 (resident)
                pl.BlockSpec((1, OUT_PAD), lambda i: (0, 0)),            # b2 (resident)
            ],
            out_specs=pl.BlockSpec((tb, OUT_PAD), lambda i: (i, 0)),
        ),
        compiler_params=pltpu.CompilerParams(
            dimension_semantics=("parallel",),
        ),
    )(x2d, y2d, w1x, tbl, w2p, b2p)

    return out[:B, :LATENT_DIM]


def init_params(key):
    """Deterministic init mimicking PyTorch Linear default (uniform +/- 1/sqrt(fan_in))."""
    k1, k2, k3, k4 = jax.random.split(key, 4)
    bound1 = 1.0 / jnp.sqrt(IN_FEATURES)
    bound2 = 1.0 / jnp.sqrt(HIDDEN)
    # Weights stored as (in_features, out_features) == torch weight.T
    w1 = jax.random.uniform(k1, (IN_FEATURES, HIDDEN), jnp.float32, -bound1, bound1)
    b1 = jax.random.uniform(k2, (HIDDEN,), jnp.float32, -bound1, bound1)
    w2 = jax.random.uniform(k3, (HIDDEN, LATENT_DIM), jnp.float32, -bound2, bound2)
    b2 = jax.random.uniform(k4, (LATENT_DIM,), jnp.float32, -bound2, bound2)
    return (w1, b1, w2, b2)


def reference_forward(x, y, params):
    """Full-precision f32 reference matching the PyTorch module exactly."""
    B = x.shape[0]
    x_flat = x.reshape(B, -1).astype(jnp.float32)
    y_oh = jax.nn.one_hot(y, N_CLASSES, dtype=jnp.float32)
    inputs = jnp.concatenate([x_flat, y_oh], axis=-1)
    w1, b1, w2, b2 = params
    h = jnp.maximum(inputs @ w1 + b1, 0.0)
    return h @ w2 + b2


if __name__ == "__main__":
    key = jax.random.PRNGKey(0)
    kx, ky, kp = jax.random.split(key, 3)

    B = 2
    x = jax.random.normal(kx, (B, 1, 28, 28), jnp.float32)   # NCHW like PyTorch
    y = jax.random.randint(ky, (B,), 0, N_CLASSES, jnp.int32)
    params = init_params(kp)

    z = mlp_encoder_forward(x, y, params)
    z = jax.block_until_ready(z)

    z_ref = reference_forward(x, y, params)
    assert z.shape == (B, LATENT_DIM)
    # bf16 activation/weight stream (f32 accumulation) -> relaxed tolerance.
    assert jnp.allclose(z, z_ref, atol=3e-2, rtol=3e-2), (z, z_ref)

    print("KERNEL_OK")
</pallas_src>

<mosaic_0001>
module attributes {stable_mosaic.version = 11 : i64} {
  func.func @_mlp_encoder_kernel(%arg0: i32, %arg1: memref<8x784xf32, #tpu.memory_space<vmem>>, %arg2: memref<8x1xi32, #tpu.memory_space<vmem>>, %arg3: memref<784x256xbf16, #tpu.memory_space<vmem>>, %arg4: memref<16x256xf32, #tpu.memory_space<vmem>>, %arg5: memref<256x128xbf16, #tpu.memory_space<vmem>>, %arg6: memref<1x128xf32, #tpu.memory_space<vmem>>, %arg7: memref<8x128xf32, #tpu.memory_space<vmem>>) attributes {dimension_semantics = [#tpu.dimension_semantics<parallel>], iteration_bounds = array<i64: 1>, scalar_prefetch = 0 : i64, scratch_operands = 0 : i64, tpu.core_type = #tpu.core_type<tc>, window_params = [{transform_indices = @transform_0, window_bounds = array<i64: 8, 784>}, {transform_indices = @transform_1, window_bounds = array<i64: 8, 1>}, {pipeline_mode = #tpu.pipeline_mode<synchronous>, transform_indices = @transform_2, window_bounds = array<i64: 784, 256>}, {pipeline_mode = #tpu.pipeline_mode<synchronous>, transform_indices = @transform_3, window_bounds = array<i64: 16, 256>}, {pipeline_mode = #tpu.pipeline_mode<synchronous>, transform_indices = @transform_4, window_bounds = array<i64: 256, 128>}, {pipeline_mode = #tpu.pipeline_mode<synchronous>, transform_indices = @transform_5, window_bounds = array<i64: 1, 128>}, {transform_indices = @transform_6, window_bounds = array<i64: 8, 128>}]} {
    %c0 = arith.constant 0 : index
    %c0_0 = arith.constant 0 : index
    %0 = vector.load %arg1[%c0, %c0_0] : memref<8x784xf32, #tpu.memory_space<vmem>>, vector<8x784xf32>
    %1 = arith.truncf %0 : vector<8x784xf32> to vector<8x784xbf16>
    %c0_1 = arith.constant 0 : index
    %c0_2 = arith.constant 0 : index
    %2 = vector.load %arg3[%c0_1, %c0_2] : memref<784x256xbf16, #tpu.memory_space<vmem>>, vector<784x256xbf16>
    %cst = arith.constant dense<0.000000e+00> : vector<8x256xf32>
    %3 = tpu.matmul %1, %2, %cst {dimension_numbers = #tpu.dot_dimension_numbers<[1], [0], [0], [1], [0, 0, 1, 1], [], []>} : vector<8x784xbf16>, vector<784x256xbf16>, vector<8x256xf32> -> vector<8x256xf32>
    %c0_3 = arith.constant 0 : index
    %c0_4 = arith.constant 0 : index
    %4 = vector.load %arg2[%c0_3, %c0_4] : memref<8x1xi32, #tpu.memory_space<vmem>>, vector<8x1xi32>
    %5 = tpu.iota {dimensions = array<i32: 1>} : vector<8x16xi32>
    %6 = vector.broadcast %4 : vector<8x1xi32> to vector<8x16xi32>
    %7 = arith.cmpi eq, %6, %5 : vector<8x16xi32>
    %8 = arith.extui %7 : vector<8x16xi1> to vector<8x16xi32>
    %9 = arith.sitofp %8 : vector<8x16xi32> to vector<8x16xf32>
    %c0_5 = arith.constant 0 : index
    %c0_6 = arith.constant 0 : index
    %10 = vector.load %arg4[%c0_5, %c0_6] : memref<16x256xf32, #tpu.memory_space<vmem>>, vector<16x256xf32>
    %cst_7 = arith.constant dense<0.000000e+00> : vector<8x256xf32>
    %11 = tpu.matmul %9, %10, %cst_7 {dimension_numbers = #tpu.dot_dimension_numbers<[1], [0], [0], [1], [0, 0, 1, 1], [], []>} : vector<8x16xf32>, vector<16x256xf32>, vector<8x256xf32> -> vector<8x256xf32>
    %12 = arith.addf %3, %11 : vector<8x256xf32>
    %cst_8 = arith.constant 0.000000e+00 : f32
    %13 = vector.broadcast %cst_8 : f32 to vector<8x256xf32>
    %14 = arith.maximumf %12, %13 : vector<8x256xf32>
    %15 = arith.truncf %14 : vector<8x256xf32> to vector<8x256xbf16>
    %c0_9 = arith.constant 0 : index
    %c0_10 = arith.constant 0 : index
    %16 = vector.load %arg5[%c0_9, %c0_10] : memref<256x128xbf16, #tpu.memory_space<vmem>>, vector<256x128xbf16>
    %cst_11 = arith.constant dense<0.000000e+00> : vector<8x128xf32>
    %17 = tpu.matmul %15, %16, %cst_11 {dimension_numbers = #tpu.dot_dimension_numbers<[1], [0], [0], [1], [0, 0, 1, 1], [], []>} : vector<8x256xbf16>, vector<256x128xbf16>, vector<8x128xf32> -> vector<8x128xf32>
    %c0_12 = arith.constant 0 : index
    %c0_13 = arith.constant 0 : index
    %18 = vector.load %arg6[%c0_12, %c0_13] : memref<1x128xf32, #tpu.memory_space<vmem>>, vector<1x128xf32>
    %19 = vector.broadcast %18 : vector<1x128xf32> to vector<8x128xf32>
    %20 = arith.addf %17, %19 : vector<8x128xf32>
    %c0_14 = arith.constant 0 : index
    %c0_15 = arith.constant 0 : index
    %21 = vector.load %arg7[%c0_14, %c0_15] : memref<8x128xf32, #tpu.memory_space<vmem>>, vector<8x128xf32>
    tpu.vector_store %arg7[%c0_14, %c0_15], %20 {strides = array<i32>} : memref<8x128xf32, #tpu.memory_space<vmem>>, vector<8x128xf32>,
    return
  }
  func.func @transform_0(%arg0: i32) -> (i32, i32) {
    %c0_i32 = arith.constant 0 : i32
    %c0_i32_0 = arith.constant 0 : i32
    return %arg0, %c0_i32 : i32, i32
  }
  func.func @transform_1(%arg0: i32) -> (i32, i32) {
    %c0_i32 = arith.constant 0 : i32
    %c0_i32_0 = arith.constant 0 : i32
    return %arg0, %c0_i32 : i32, i32
  }
  func.func @transform_2(%arg0: i32) -> (i32, i32) {
    %c0_i32 = arith.constant 0 : i32
    %c0_i32_0 = arith.constant 0 : i32
    %c0_i32_1 = arith.constant 0 : i32
    return %c0_i32, %c0_i32_0 : i32, i32
  }
  func.func @transform_3(%arg0: i32) -> (i32, i32) {
    %c0_i32 = arith.constant 0 : i32
    %c0_i32_0 = arith.constant 0 : i32
    %c0_i32_1 = arith.constant 0 : i32
    return %c0_i32, %c0_i32_0 : i32, i32
  }
  func.func @transform_4(%arg0: i32) -> (i32, i32) {
    %c0_i32 = arith.constant 0 : i32
    %c0_i32_0 = arith.constant 0 : i32
    %c0_i32_1 = arith.constant 0 : i32
    return %c0_i32, %c0_i32_0 : i32, i32
  }
  func.func @transform_5(%arg0: i32) -> (i32, i32) {
    %c0_i32 = arith.constant 0 : i32
    %c0_i32_0 = arith.constant 0 : i32
    %c0_i32_1 = arith.constant 0 : i32
    return %c0_i32, %c0_i32_0 : i32, i32
  }
  func.func @transform_6(%arg0: i32) -> (i32, i32) {
    %c0_i32 = arith.constant 0 : i32
    %c0_i32_0 = arith.constant 0 : i32
    return %arg0, %c0_i32 : i32, i32
  }
}

</mosaic_0001>

<llo_original>
// kernel: tpu_custom_call.1
$region0: #{tpu_custom_call.1}
  #allocation0 [shape = 'u32[]', space=smem, size = 0x4, offset = 0x4, fixed_abs, tag = 'smem constant byte address 0x4 - core index']
  #allocation1 [shape = 'u32[144,128]{1,0:T(1,128)}', space=vmem, size = 0x12000, scoped, tag = 'internal scratch']
  %s0 = inlined_call_operand.hbm [shape: f32[2,784], index: 0, kind: input, shape index: {}]
  %s1 = inlined_call_operand.vmem [shape: s32[2,1], index: 1, kind: input, shape index: {}]
  %s2 = inlined_call_operand.hbm [shape: bf16[784,256], index: 2, kind: input, shape index: {}]
  %s3 = inlined_call_operand.hbm [shape: f32[16,256], index: 3, kind: input, shape index: {}]
  %s4 = inlined_call_operand.hbm [shape: bf16[256,128], index: 4, kind: input, shape index: {}]
  %s5 = inlined_call_operand.vmem [shape: f32[1,128], index: 5, kind: input, shape index: {}]
  %s6 = inlined_call_operand.hbm [shape: f32[8,128], index: 6, kind: output, shape index: {}]
  %s7 = sld [smem:[#allocation0]]
  $region50: #{tpu_custom_call.1} parent=0
    _
  %s9 = ssub.s32 1, %s7
  %s10 = scalar_select 0, %s9, %s7
  $region1: #{tpu_custom_call.1} parent=0
    #allocation2 [shape = 'u8[28672]{0}', space=vmem, size = 0x7000, scoped, tag = 'input window, operand 0, single buffered']
    #allocation3 [shape = 's32[1]{0}', space=sflag, size = 0x4, scoped, tag = 'scoped memory for tpu_custom_call.1']
    #allocation4 [shape = 's32[1]{0}', space=sflag, size = 0x4, scoped, tag = 'scoped memory for tpu_custom_call.1']
    #allocation5 [shape = 'u8[401408]{0}', space=vmem, size = 0x62000, scoped, tag = 'input window, operand 2, single buffered']
    #allocation6 [shape = 's32[1]{0}', space=sflag, size = 0x4, scoped, tag = 'scoped memory for tpu_custom_call.1']
    #allocation7 [shape = 'u8[16384]{0}', space=vmem, size = 0x4000, scoped, tag = 'input window, operand 3, single buffered']
    #allocation8 [shape = 'u8[65536]{0}', space=vmem, size = 0x10000, scoped, tag = 'input window, operand 4, single buffered']
    #allocation9 [shape = 's32[1]{0}', space=sflag, size = 0x4, scoped, tag = 'scoped memory for tpu_custom_call.1']
    #allocation10 [shape = 'u8[4096]{0}', space=vmem, size = 0x1000, scoped, tag = 'output window, operand 0, single buffered']
    %11 = vsyncpa [#allocation3], 0
    %12 = vsyncpa [#allocation6], 0
    %13 = vsyncpa [#allocation9], 0
    %14 = vsyncpa [#allocation4], 0
    // Predicated region
    $region2: #{tpu_custom_call.1} parent=1 // pred_check
      _
    $region3: #{tpu_custom_call.1} parent=1 // pred_check_branch
      %16 = sbr.rel (0) target = $region5
    $region4: #{tpu_custom_call.1} parent=1 // pred_region
      %s18 = ssub.s32 896, 224
      %19 = vsyncadd [#allocation3], %s18
      %s20 = sshll.u32 [#allocation2], 4
      %s21 = int_to_ptr.vmem [resolvable:$true] %s20
      %26 = dma.hbm_to_vmem [thread:$0]  %s0, 224, %s21, [#allocation3], 224, 224, 14
    $region5: #{tpu_custom_call.1} parent=1 // pred_fallthru
      _
    // Predicated region
    $region6: #{tpu_custom_call.1} parent=1 // pred_check
      _
    $region7: #{tpu_custom_call.1} parent=1 // pred_check_branch
      %28 = sbr.rel (0) target = $region9
    $region8: #{tpu_custom_call.1} parent=1 // pred_region
      _
    $region9: #{tpu_custom_call.1} parent=1 // pred_fallthru
      _
    // Predicated region
    $region10: #{tpu_custom_call.1} parent=1 // pred_check
      _
    $region11: #{tpu_custom_call.1} parent=1 // pred_check_branch
      %30 = sbr.rel (0) target = $region13
    $region12: #{tpu_custom_call.1} parent=1 // pred_region
      %s32 = ssub.s32 12544, 12544
      %33 = vsyncadd [#allocation6], %s32
      %s34 = sshll.u32 [#allocation5], 4
      %s35 = int_to_ptr.vmem [resolvable:$true] %s34
      %40 = dma.hbm_to_vmem [thread:$0]  %s2, 12544, %s35, [#allocation6], 128, 128, 8
    $region13: #{tpu_custom_call.1} parent=1 // pred_fallthru
      _
    // Predicated region
    $region14: #{tpu_custom_call.1} parent=1 // pred_check
      _
    $region15: #{tpu_custom_call.1} parent=1 // pred_check_branch
      %42 = sbr.rel (0) target = $region17
    $region16: #{tpu_custom_call.1} parent=1 // pred_region
      %s44 = ssub.s32 512, 512
      %45 = vsyncadd [#allocation6], %s44
      %s46 = sshll.u32 [#allocation7], 4
      %s47 = int_to_ptr.vmem [resolvable:$true] %s46
      %52 = dma.hbm_to_vmem [thread:$0]  %s3, 512, %s47, [#allocation6], 256, 256, 16
    $region17: #{tpu_custom_call.1} parent=1 // pred_fallthru
      _
    // Predicated region
    $region18: #{tpu_custom_call.1} parent=1 // pred_check
      _
    $region19: #{tpu_custom_call.1} parent=1 // pred_check_branch
      %54 = sbr.rel (0) target = $region21
    $region20: #{tpu_custom_call.1} parent=1 // pred_region
      %s56 = ssub.s32 2048, 2048
      %57 = vsyncadd [#allocation9], %s56
      %s58 = sshll.u32 [#allocation8], 4
      %s59 = int_to_ptr.vmem [resolvable:$true] %s58
      %64 = dma.hbm_to_vmem [thread:$0]  %s4, 2048, %s59, [#allocation9], 64, 64, 4
    $region21: #{tpu_custom_call.1} parent=1 // pred_fallthru
      _
    // Predicated region
    $region22: #{tpu_custom_call.1} parent=1 // pred_check
      _
    $region23: #{tpu_custom_call.1} parent=1 // pred_check_branch
      %66 = sbr.rel (0) target = $region25
    $region24: #{tpu_custom_call.1} parent=1 // pred_region
      _
    $region25: #{tpu_custom_call.1} parent=1 // pred_fallthru
      _
    // Predicated region
    $region26: #{tpu_custom_call.1} parent=1 // pred_check
      _
    $region27: #{tpu_custom_call.1} parent=1 // pred_check_branch
      %68 = sbr.rel (0) target = $region29
    $region28: #{tpu_custom_call.1} parent=1 // pred_region
      %69 = dma.done [#allocation3], 896
    $region29: #{tpu_custom_call.1} parent=1 // pred_fallthru
      _
    // Predicated region
    $region30: #{tpu_custom_call.1} parent=1 // pred_check
      _
    $region31: #{tpu_custom_call.1} parent=1 // pred_check_branch
      %71 = sbr.rel (0) target = $region33
    $region32: #{tpu_custom_call.1} parent=1 // pred_region
      %72 = dma.done [#allocation6], 12544
    $region33: #{tpu_custom_call.1} parent=1 // pred_fallthru
      _
    // Predicated region
    $region34: #{tpu_custom_call.1} parent=1 // pred_check
      _
    $region35: #{tpu_custom_call.1} parent=1 // pred_check_branch
      %74 = sbr.rel (0) target = $region37
    $region36: #{tpu_custom_call.1} parent=1 // pred_region
      %75 = dma.done [#allocation6], 512
    $region37: #{tpu_custom_call.1} parent=1 // pred_fallthru
      _
    // Predicated region
    $region38: #{tpu_custom_call.1} parent=1 // pred_check
      _
    $region39: #{tpu_custom_call.1} parent=1 // pred_check_branch
      %77 = sbr.rel (0) target = $region41
    $region40: #{tpu_custom_call.1} parent=1 // pred_region
      %78 = dma.done [#allocation9], 2048
    $region41: #{tpu_custom_call.1} parent=1 // pred_fallthru
      _
    %v80 = vld [vmem:[#allocation2] sm:$0xff]
    %v81 = vld [vmem:[#allocation2 + $0x8] sm:$0x3f]
    %v82 = vld [vmem:[#allocation2 + $0xe] sm:$0xff]
    %v83 = vld [vmem:[#allocation2 + $0x16] sm:$0x3f]
    %v84 = vld [vmem:[#allocation2 + $0x1c] sm:$0xff]
    %v85 = vld [vmem:[#allocation2 + $0x24] sm:$0x3f]
    %v86 = vld [vmem:[#allocation2 + $0x2a] sm:$0xff]
    %v87 = vld [vmem:[#allocation2 + $0x32] sm:$0x3f]
    %v96 = vcombine.low %v80, %v82
    %v97 = vcombine.high %v80, %v82
    %v98 = vcombine.low %v84, %v86
    %v99 = vcombine.high %v84, %v86
    %v101 = vunpack.c.l.s4 1983009808
    %v102 = vunpack.c.0.s8 %v101
    %v103 = vlaneseq
    %v104 = vshrl.u32 %v103, 7
    %v105 = vsub.s32 %v102, %v104
    %v106 = vrot.slane %v96, %v105
    %v108 = vunpack.c.l.s4 1983009808
    %v109 = vunpack.c.0.s8 %v108
    %v110 = vlaneseq
    %v111 = vshrl.u32 %v110, 7
    %v112 = vsub.s32 %v109, %v111
    %v113 = vrot.slane %v97, %v112
    %v115 = vunpack.c.l.s4 1983009808
    %v116 = vunpack.c.0.s8 %v115
    %v117 = vlaneseq
    %v118 = vshrl.u32 %v117, 7
    %v119 = vsub.s32 %v116, %v118
    %v120 = vrot.slane %v98, %v119
    %v122 = vunpack.c.l.s4 1983009808
    %v123 = vunpack.c.0.s8 %v122
    %v124 = vlaneseq
    %v125 = vshrl.u32 %v124, 7
    %v126 = vsub.s32 %v123, %v125
    %v127 = vrot.slane %v99, %v126
    %v128 = vcombine.low %v106, %v120
    %v129 = vcombine.high %v106, %v120
    %v130 = vcombine.low %v113, %v127
    %v131 = vcombine.high %v113, %v127
    %v132 = vcombine.low %v81, %v83
    %v133 = vcombine.high %v81, %v83
    %v134 = vcombine.low %v85, %v87
    %v135 = vcombine.high %v85, %v87
    %v137 = vunpack.c.l.s4 1983009808
    %v138 = vunpack.c.0.s8 %v137
    %v139 = vlaneseq
    %v140 = vshrl.u32 %v139, 7
    %v141 = vsub.s32 %v138, %v140
    %v142 = vrot.slane %v132, %v141
    %v144 = vunpack.c.l.s4 1983009808
    %v145 = vunpack.c.0.s8 %v144
    %v146 = vlaneseq
    %v147 = vshrl.u32 %v146, 7
    %v148 = vsub.s32 %v145, %v147
    %v149 = vrot.slane %v133, %v148
    %v151 = vunpack.c.l.s4 1983009808
    %v152 = vunpack.c.0.s8 %v151
    %v153 = vlaneseq
    %v154 = vshrl.u32 %v153, 7
    %v155 = vsub.s32 %v152, %v154
    %v156 = vrot.slane %v134, %v155
    %v158 = vunpack.c.l.s4 1983009808
    %v159 = vunpack.c.0.s8 %v158
    %v160 = vlaneseq
    %v161 = vshrl.u32 %v160, 7
    %v162 = vsub.s32 %v159, %v161
    %v163 = vrot.slane %v135, %v162
    %v164 = vcombine.low %v142, %v156
    %v165 = vcombine.high %v142, %v156
    %v166 = vcombine.low %v149, %v163
    %v174 = vpack.c.bf16 %v128, %v128
    %v175 = vpack.c.bf16 %v129, %v129
    %v176 = vpack.c.bf16 %v130, %v130
    %v177 = vpack.c.bf16 %v131, %v131
    %v178 = vpack.c.bf16 %v164, %v164
    %v179 = vpack.c.bf16 %v165, %v165
    %v180 = vpack.c.bf16 %v166, %v166
    %v181 = vld [vmem:[#allocation5] sm:$0xff]
    %v182 = vld [vmem:[#allocation5 + $0x8] sm:$0xff]
    %v183 = vld [vmem:[#allocation5 + $0x10] sm:$0xff]
    %v184 = vld [vmem:[#allocation5 + $0x18] sm:$0xff]
    %v185 = vld [vmem:[#allocation5 + $0x20] sm:$0xff]
    %v186 = vld [vmem:[#allocation5 + $0x28] sm:$0xff]
    %v187 = vld [vmem:[#allocation5 + $0x30] sm:$0xff]
    %v188 = vld [vmem:[#allocation5 + $0x38] sm:$0xff]
    %v189 = vld [vmem:[#allocation5 + $0x40] sm:$0xff]
    %v190 = vld [vmem:[#allocation5 + $0x48] sm:$0xff]
    %v191 = vld [vmem:[#allocation5 + $0x50] sm:$0xff]
    %v192 = vld [vmem:[#allocation5 + $0x58] sm:$0xff]
    %v193 = vld [vmem:[#allocation5 + $0x60] sm:$0xff]
    %v194 = vld [vmem:[#allocation5 + $0x68] sm:$0xff]
    %v195 = vld [vmem:[#allocation5 + $0x70] sm:$0xff]
    %v196 = vld [vmem:[#allocation5 + $0x78] sm:$0xff]
    %v197 = vld [vmem:[#allocation5 + $0x80] sm:$0xff]
    %v198 = vld [vmem:[#allocation5 + $0x88] sm:$0xff]
    %v199 = vld [vmem:[#allocation5 + $0x90] sm:$0xff]
    %v200 = vld [vmem:[#allocation5 + $0x98] sm:$0xff]
    %v201 = vld [vmem:[#allocation5 + $0xa0] sm:$0xff]
    %v202 = vld [vmem:[#allocation5 + $0xa8] sm:$0xff]
    %v203 = vld [vmem:[#allocation5 + $0xb0] sm:$0xff]
    %v204 = vld [vmem:[#allocation5 + $0xb8] sm:$0xff]
    %v205 = vld [vmem:[#allocation5 + $0xc0] sm:$0xff]
    %v206 = vld [vmem:[#allocation5 + $0xc8] sm:$0xff]
    %v207 = vld [vmem:[#allocation5 + $0xd0] sm:$0xff]
    %v208 = vld [vmem:[#allocation5 + $0xd8] sm:$0xff]
    %v209 = vld [vmem:[#allocation5 + $0xe0] sm:$0xff]
    %v210 = vld [vmem:[#allocation5 + $0xe8] sm:$0xff]
    %v211 = vld [vmem:[#allocation5 + $0xf0] sm:$0xff]
    %v212 = vld [vmem:[#allocation5 + $0xf8] sm:$0xff]
    %v213 = vld [vmem:[#allocation5 + $0x100] sm:$0xff]
    %v214 = vld [vmem:[#allocation5 + $0x108] sm:$0xff]
    %v215 = vld [vmem:[#allocation5 + $0x110] sm:$0xff]
    %v216 = vld [vmem:[#allocation5 + $0x118] sm:$0xff]
    %v217 = vld [vmem:[#allocation5 + $0x120] sm:$0xff]
    %v218 = vld [vmem:[#allocation5 + $0x128] sm:$0xff]
    %v219 = vld [vmem:[#allocation5 + $0x130] sm:$0xff]
    %v220 = vld [vmem:[#allocation5 + $0x138] sm:$0xff]
    %v221 = vld [vmem:[#allocation5 + $0x140] sm:$0xff]
    %v222 = vld [vmem:[#allocation5 + $0x148] sm:$0xff]
    %v223 = vld [vmem:[#allocation5 + $0x150] sm:$0xff]
    %v224 = vld [vmem:[#allocation5 + $0x158] sm:$0xff]
    %v225 = vld [vmem:[#allocation5 + $0x160] sm:$0xff]
    %v226 = vld [vmem:[#allocation5 + $0x168] sm:$0xff]
    %v227 = vld [vmem:[#allocation5 + $0x170] sm:$0xff]
    %v228 = vld [vmem:[#allocation5 + $0x178] sm:$0xff]
    %v229 = vld [vmem:[#allocation5 + $0x180] sm:$0xff]
    %v230 = vld [vmem:[#allocation5 + $0x188] sm:$0xff]
    %v231 = vld [vmem:[#allocation5 + $0x190] sm:$0xff]
    %v232 = vld [vmem:[#allocation5 + $0x198] sm:$0xff]
    %v233 = vld [vmem:[#allocation5 + $0x1a0] sm:$0xff]
    %v234 = vld [vmem:[#allocation5 + $0x1a8] sm:$0xff]
    %v235 = vld [vmem:[#allocation5 + $0x1b0] sm:$0xff]
    %v236 = vld [vmem:[#allocation5 + $0x1b8] sm:$0xff]
    %v237 = vld [vmem:[#allocation5 + $0x1c0] sm:$0xff]
    %v238 = vld [vmem:[#allocation5 + $0x1c8] sm:$0xff]
    %v239 = vld [vmem:[#allocation5 + $0x1d0] sm:$0xff]
    %v240 = vld [vmem:[#allocation5 + $0x1d8] sm:$0xff]
    %v241 = vld [vmem:[#allocation5 + $0x1e0] sm:$0xff]
    %v242 = vld [vmem:[#allocation5 + $0x1e8] sm:$0xff]
    %v243 = vld [vmem:[#allocation5 + $0x1f0] sm:$0xff]
    %v244 = vld [vmem:[#allocation5 + $0x1f8] sm:$0xff]
    %v245 = vld [vmem:[#allocation5 + $0x200] sm:$0xff]
    %v246 = vld [vmem:[#allocation5 + $0x208] sm:$0xff]
    %v247 = vld [vmem:[#allocation5 + $0x210] sm:$0xff]
    %v248 = vld [vmem:[#allocation5 + $0x218] sm:$0xff]
    %v249 = vld [vmem:[#allocation5 + $0x220] sm:$0xff]
    %v250 = vld [vmem:[#allocation5 + $0x228] sm:$0xff]
    %v251 = vld [vmem:[#allocation5 + $0x230] sm:$0xff]
    %v252 = vld [vmem:[#allocation5 + $0x238] sm:$0xff]
    %v253 = vld [vmem:[#allocation5 + $0x240] sm:$0xff]
    %v254 = vld [vmem:[#allocation5 + $0x248] sm:$0xff]
    %v255 = vld [vmem:[#allocation5 + $0x250] sm:$0xff]
    %v256 = vld [vmem:[#allocation5 + $0x258] sm:$0xff]
    %v257 = vld [vmem:[#allocation5 + $0x260] sm:$0xff]
    %v258 = vld [vmem:[#allocation5 + $0x268] sm:$0xff]
    %v259 = vld [vmem:[#allocation5 + $0x270] sm:$0xff]
    %v260 = vld [vmem:[#allocation5 + $0x278] sm:$0xff]
    %v261 = vld [vmem:[#allocation5 + $0x280] sm:$0xff]
    %v262 = vld [vmem:[#allocation5 + $0x288] sm:$0xff]
    %v263 = vld [vmem:[#allocation5 + $0x290] sm:$0xff]
    %v264 = vld [vmem:[#allocation5 + $0x298] sm:$0xff]
    %v265 = vld [vmem:[#allocation5 + $0x2a0] sm:$0xff]
    %v266 = vld [vmem:[#allocation5 + $0x2a8] sm:$0xff]
    %v267 = vld [vmem:[#allocation5 + $0x2b0] sm:$0xff]
    %v268 = vld [vmem:[#allocation5 + $0x2b8] sm:$0xff]
    %v269 = vld [vmem:[#allocation5 + $0x2c0] sm:$0xff]
    %v270 = vld [vmem:[#allocation5 + $0x2c8] sm:$0xff]
    %v271 = vld [vmem:[#allocation5 + $0x2d0] sm:$0xff]
    %v272 = vld [vmem:[#allocation5 + $0x2d8] sm:$0xff]
    %v273 = vld [vmem:[#allocation5 + $0x2e0] sm:$0xff]
    %v274 = vld [vmem:[#allocation5 + $0x2e8] sm:$0xff]
    %v275 = vld [vmem:[#allocation5 + $0x2f0] sm:$0xff]
    %v276 = vld [vmem:[#allocation5 + $0x2f8] sm:$0xff]
    %v277 = vld [vmem:[#allocation5 + $0x300] sm:$0xff]
    %v278 = vld [vmem:[#allocation5 + $0x308] sm:$0xff]
    %v279 = vld [vmem:[%s1] sm:$0xff]
    %v280 = vlaneseq
    %v281 = vand.u32 %v280, 127
    %282 = vset.pattern.permute.xlu0 0
    %283 = vperm.xlu0 %282, %v279
    %v284 = vpop.permute.xlu0 %283
    %vm285 = vcmp.eq.s32.totalorder %v284, %v281
    %v286 = vsel %vm285, 1, 0
    %v287 = vcvt.s32.f32 %v286
    %v288 = vld [vmem:[#allocation7] sm:$0xff]
    %v289 = vld [vmem:[#allocation7 + $0x8] sm:$0xff]
    %v290 = vld [vmem:[#allocation7 + $0x10] sm:$0xff]
    %v291 = vld [vmem:[#allocation7 + $0x18] sm:$0xff]
    %vm292 = vcmask 130048
    %v294 = vsel %vm292, %v287, 0
    %296 = vmatprep.subr.mxu0 0.0
    %297 = vmatpush1.msra.mxu0 0.0
    %298 = vmatprep.subr.mxu0 0.0
    %299 = vmatpush1.msra.mxu0 0.0
    %300 = vmatprep.subr.mxu0 0.0
    %301 = vmatpush1.msra.mxu0 0.0
    %302 = vmatprep.subr.mxu0 0.0
    %303 = vmatpush1.msra.mxu0 0.0
    %304 = vmatprep.subr.mxu0 0.0
    %305 = vmatpush1.msra.mxu0 0.0
    %306 = vmatprep.subr.mxu0 0.0
    %307 = vmatpush1.msra.mxu0 0.0
    %308 = vmatprep.subr.mxu0 0.0
    %309 = vmatpush1.msra.mxu0 0.0
    %310 = vmatprep.subr.mxu0 0.0
    %311 = vmatpush1.msra.mxu0 0.0
    %312 = vmatprep.subr.mxu0 0.0
    %313 = vmatpush1.msra.mxu0 0.0
    %314 = vmatprep.subr.mxu0 0.0
    %315 = vmatpush1.msra.mxu0 0.0
    %316 = vmatprep.subr.mxu0 0.0
    %317 = vmatpush1.msra.mxu0 0.0
    %318 = vmatprep.subr.mxu0 0.0
    %319 = vmatpush1.msra.mxu0 0.0
    %320 = vmatprep.subr.mxu0 0.0
    %321 = vmatpush1.msra.mxu0 0.0
    %322 = vmatprep.subr.mxu0 0.0
    %323 = vmatpush1.msra.mxu0 0.0
    %324 = vmatprep.subr.mxu0 %v291
    %325 = vmatpush1.msra.mxu0 %v290
    %326 = vmatprep.subr.mxu0 %v289
    %327 = vmatpush1.msra.mxu0 %v288
    %328 = vmatprep.subr.mxu0 0.0
    %329 = vmatpush2.msra.mxu0 0.0
    %330 = vmatprep.subr.mxu0 0.0
    %331 = vmatpush2.msra.mxu0 0.0
    %332 = vmatprep.subr.mxu0 0.0
    %333 = vmatpush2.msra.mxu0 0.0
    %334 = vmatprep.subr.mxu0 0.0
    %335 = vmatpush2.msra.mxu0 0.0
    %336 = vmatprep.subr.mxu0 0.0
    %337 = vmatpush2.msra.mxu0 0.0
    %338 = vmatprep.subr.mxu0 0.0
    %339 = vmatpush2.msra.mxu0 0.0
    %340 = vmatprep.subr.mxu0 0.0
    %341 = vmatpush2.msra.mxu0 0.0
    %342 = vmatprep.subr.mxu0 0.0
    %343 = vmatpush2.msra.mxu0 0.0
    %344 = vmatprep.subr.mxu0 0.0
    %345 = vmatpush2.msra.mxu0 0.0
    %346 = vmatprep.subr.mxu0 0.0
    %347 = vmatpush2.msra.mxu0 0.0
    %348 = vmatprep.subr.mxu0 0.0
    %349 = vmatpush2.msra.mxu0 0.0
    %350 = vmatprep.subr.mxu0 0.0
    %351 = vmatpush2.msra.mxu0 0.0
    %352 = vmatprep.subr.mxu0 0.0
    %353 = vmatpush2.msra.mxu0 0.0
    %354 = vmatprep.subr.mxu0 0.0
    %355 = vmatpush2.msra.mxu0 0.0
    %356 = vmatprep.subr.mxu0 0.0
    %357 = vmatpush2.msra.mxu0 0.0
    %358 = vmatprep.subr.mxu0 0.0
    %359 = vmatpush2.msra.mxu0 0.0
    %360 = vmatprep.mubr.f32.mxu0 0.0
    %361 = vmatmul.mubr.f32.gmra.mxu0 %v294
    %v362 = vpop.f32.mrf.mxu0
    %v363 = vadd.f32 0.0, %v362
    %v364 = vpop.f32.mrf.mxu0
    %v365 = vadd.f32 0.0, %v364
    %366 = vdwg.mxu0
    %v465 = vunpack.c.l.b16 %v181
    %v466 = vunpack.c.h.b16 %v181
    %v467 = vunpack.c.l.b16 %v182
    %v468 = vunpack.c.h.b16 %v182
    %v469 = vunpack.c.l.b16 %v183
    %v470 = vunpack.c.h.b16 %v183
    %v471 = vunpack.c.l.b16 %v184
    %v472 = vunpack.c.h.b16 %v184
    %v473 = vunpack.c.l.b16 %v185
    %v474 = vunpack.c.h.b16 %v185
    %v475 = vunpack.c.l.b16 %v186
    %v476 = vunpack.c.h.b16 %v186
    %v477 = vunpack.c.l.b16 %v187
    %v478 = vunpack.c.h.b16 %v187
    %v479 = vunpack.c.l.b16 %v188
    %v480 = vunpack.c.h.b16 %v188
    %v481 = vunpack.c.l.b16 %v189
    %v482 = vunpack.c.h.b16 %v189
    %v483 = vunpack.c.l.b16 %v190
    %v484 = vunpack.c.h.b16 %v190
    %v485 = vunpack.c.l.b16 %v191
    %v486 = vunpack.c.h.b16 %v191
    %v487 = vunpack.c.l.b16 %v192
    %v488 = vunpack.c.h.b16 %v192
    %v489 = vunpack.c.l.b16 %v193
    %v490 = vunpack.c.h.b16 %v193
    %v491 = vunpack.c.l.b16 %v194
    %v492 = vunpack.c.h.b16 %v194
    %v493 = vunpack.c.l.b16 %v195
    %v494 = vunpack.c.h.b16 %v195
    %v495 = vunpack.c.l.b16 %v196
    %v496 = vunpack.c.h.b16 %v196
    %v497 = vunpack.c.l.b16 %v197
    %v498 = vunpack.c.h.b16 %v197
    %v499 = vunpack.c.l.b16 %v198
    %v500 = vunpack.c.h.b16 %v198
    %v501 = vunpack.c.l.b16 %v199
    %v502 = vunpack.c.h.b16 %v199
    %v503 = vunpack.c.l.b16 %v200
    %v504 = vunpack.c.h.b16 %v200
    %v505 = vunpack.c.l.b16 %v201
    %v506 = vunpack.c.h.b16 %v201
    %v507 = vunpack.c.l.b16 %v202
    %v508 = vunpack.c.h.b16 %v202
    %v509 = vunpack.c.l.b16 %v203
    %v510 = vunpack.c.h.b16 %v203
    %v511 = vunpack.c.l.b16 %v204
    %v512 = vunpack.c.h.b16 %v204
    %v513 = vunpack.c.l.b16 %v205
    %v514 = vunpack.c.h.b16 %v205
    %v515 = vunpack.c.l.b16 %v206
    %v516 = vunpack.c.h.b16 %v206
    %v517 = vunpack.c.l.b16 %v207
    %v518 = vunpack.c.h.b16 %v207
    %v519 = vunpack.c.l.b16 %v208
    %v520 = vunpack.c.h.b16 %v208
    %v521 = vunpack.c.l.b16 %v209
    %v522 = vunpack.c.h.b16 %v209
    %v523 = vunpack.c.l.b16 %v210
    %v524 = vunpack.c.h.b16 %v210
    %v525 = vunpack.c.l.b16 %v211
    %v526 = vunpack.c.h.b16 %v211
    %v527 = vunpack.c.l.b16 %v212
    %v528 = vunpack.c.h.b16 %v212
    %v529 = vunpack.c.l.b16 %v213
    %v530 = vunpack.c.h.b16 %v213
    %v531 = vunpack.c.l.b16 %v214
    %v532 = vunpack.c.h.b16 %v214
    %v533 = vunpack.c.l.b16 %v215
    %v534 = vunpack.c.h.b16 %v215
    %v535 = vunpack.c.l.b16 %v216
    %v536 = vunpack.c.h.b16 %v216
    %v537 = vunpack.c.l.b16 %v217
    %v538 = vunpack.c.h.b16 %v217
    %v539 = vunpack.c.l.b16 %v218
    %v540 = vunpack.c.h.b16 %v218
    %v541 = vunpack.c.l.b16 %v219
    %v542 = vunpack.c.h.b16 %v219
    %v543 = vunpack.c.l.b16 %v220
    %v544 = vunpack.c.h.b16 %v220
    %v545 = vunpack.c.l.b16 %v221
    %v546 = vunpack.c.h.b16 %v221
    %v547 = vunpack.c.l.b16 %v222
    %v548 = vunpack.c.h.b16 %v222
    %v549 = vunpack.c.l.b16 %v223
    %v550 = vunpack.c.h.b16 %v223
    %v551 = vunpack.c.l.b16 %v224
    %v552 = vunpack.c.h.b16 %v224
    %v553 = vunpack.c.l.b16 %v225
    %v554 = vunpack.c.h.b16 %v225
    %v555 = vunpack.c.l.b16 %v226
    %v556 = vunpack.c.h.b16 %v226
    %v557 = vunpack.c.l.b16 %v227
    %v558 = vunpack.c.h.b16 %v227
    %v559 = vunpack.c.l.b16 %v228
    %v560 = vunpack.c.h.b16 %v228
    %v561 = vunpack.c.l.b16 %v229
    %v562 = vunpack.c.h.b16 %v229
    %v563 = vunpack.c.l.b16 %v230
    %v564 = vunpack.c.h.b16 %v230
    %v565 = vunpack.c.l.b16 %v231
    %v566 = vunpack.c.h.b16 %v231
    %v567 = vunpack.c.l.b16 %v232
    %v568 = vunpack.c.h.b16 %v232
    %v569 = vunpack.c.l.b16 %v233
    %v570 = vunpack.c.h.b16 %v233
    %v571 = vunpack.c.l.b16 %v234
    %v572 = vunpack.c.h.b16 %v234
    %v573 = vunpack.c.l.b16 %v235
    %v574 = vunpack.c.h.b16 %v235
    %v575 = vunpack.c.l.b16 %v236
    %v576 = vunpack.c.h.b16 %v236
    %v577 = vunpack.c.l.b16 %v237
    %v578 = vunpack.c.h.b16 %v237
    %v579 = vunpack.c.l.b16 %v238
    %v580 = vunpack.c.h.b16 %v238
    %v581 = vunpack.c.l.b16 %v239
    %v582 = vunpack.c.h.b16 %v239
    %v583 = vunpack.c.l.b16 %v240
    %v584 = vunpack.c.h.b16 %v240
    %v585 = vunpack.c.l.b16 %v241
    %v586 = vunpack.c.h.b16 %v241
    %v587 = vunpack.c.l.b16 %v242
    %v588 = vunpack.c.h.b16 %v242
    %v589 = vunpack.c.l.b16 %v243
    %v590 = vunpack.c.h.b16 %v243
    %v591 = vunpack.c.l.b16 %v244
    %v592 = vunpack.c.h.b16 %v244
    %v593 = vunpack.c.l.b16 %v245
    %v594 = vunpack.c.h.b16 %v245
    %v595 = vunpack.c.l.b16 %v246
    %v596 = vunpack.c.h.b16 %v246
    %v597 = vunpack.c.l.b16 %v247
    %v598 = vunpack.c.h.b16 %v247
    %v599 = vunpack.c.l.b16 %v248
    %v600 = vunpack.c.h.b16 %v248
    %v601 = vunpack.c.l.b16 %v249
    %v602 = vunpack.c.h.b16 %v249
    %v603 = vunpack.c.l.b16 %v250
    %v604 = vunpack.c.h.b16 %v250
    %v605 = vunpack.c.l.b16 %v251
    %v606 = vunpack.c.h.b16 %v251
    %v607 = vunpack.c.l.b16 %v252
    %v608 = vunpack.c.h.b16 %v252
    %v609 = vunpack.c.l.b16 %v253
    %v610 = vunpack.c.h.b16 %v253
    %v611 = vunpack.c.l.b16 %v254
    %v612 = vunpack.c.h.b16 %v254
    %v613 = vunpack.c.l.b16 %v255
    %v614 = vunpack.c.h.b16 %v255
    %v615 = vunpack.c.l.b16 %v256
    %v616 = vunpack.c.h.b16 %v256
    %v617 = vunpack.c.l.b16 %v257
    %v618 = vunpack.c.h.b16 %v257
    %v619 = vunpack.c.l.b16 %v258
    %v620 = vunpack.c.h.b16 %v258
    %v621 = vunpack.c.l.b16 %v259
    %v622 = vunpack.c.h.b16 %v259
    %v623 = vunpack.c.l.b16 %v260
    %v624 = vunpack.c.h.b16 %v260
    %v625 = vunpack.c.l.b16 %v261
    %v626 = vunpack.c.h.b16 %v261
    %v627 = vunpack.c.l.b16 %v262
    %v628 = vunpack.c.h.b16 %v262
    %v629 = vunpack.c.l.b16 %v263
    %v630 = vunpack.c.h.b16 %v263
    %v631 = vunpack.c.l.b16 %v264
    %v632 = vunpack.c.h.b16 %v264
    %v633 = vunpack.c.l.b16 %v265
    %v634 = vunpack.c.h.b16 %v265
    %v635 = vunpack.c.l.b16 %v266
    %v636 = vunpack.c.h.b16 %v266
    %v637 = vunpack.c.l.b16 %v267
    %v638 = vunpack.c.h.b16 %v267
    %v639 = vunpack.c.l.b16 %v268
    %v640 = vunpack.c.h.b16 %v268
    %v641 = vunpack.c.l.b16 %v269
    %v642 = vunpack.c.h.b16 %v269
    %v643 = vunpack.c.l.b16 %v270
    %v644 = vunpack.c.h.b16 %v270
    %v645 = vunpack.c.l.b16 %v271
    %v646 = vunpack.c.h.b16 %v271
    %v647 = vunpack.c.l.b16 %v272
    %v648 = vunpack.c.h.b16 %v272
    %v649 = vunpack.c.l.b16 %v273
    %v650 = vunpack.c.h.b16 %v273
    %v651 = vunpack.c.l.b16 %v274
    %v652 = vunpack.c.h.b16 %v274
    %v653 = vunpack.c.l.b16 %v275
    %v654 = vunpack.c.h.b16 %v275
    %v655 = vunpack.c.l.b16 %v276
    %v656 = vunpack.c.h.b16 %v276
    %v657 = vunpack.c.l.b16 %v277
    %v658 = vunpack.c.h.b16 %v277
    %v659 = vunpack.c.l.b16 %v278
    %v660 = vunpack.c.h.b16 %v278
    %v661 = vpack.c.b16 %v467, %v465
    %v662 = vpack.c.b16 %v468, %v466
    %v663 = vpack.c.b16 %v471, %v469
    %v664 = vpack.c.b16 %v472, %v470
    %v665 = vpack.c.b16 %v475, %v473
    %v666 = vpack.c.b16 %v476, %v474
    %v667 = vpack.c.b16 %v479, %v477
    %v668 = vpack.c.b16 %v480, %v478
    %v669 = vpack.c.b16 %v483, %v481
    %v670 = vpack.c.b16 %v484, %v482
    %v671 = vpack.c.b16 %v487, %v485
    %v672 = vpack.c.b16 %v488, %v486
    %v673 = vpack.c.b16 %v491, %v489
    %v674 = vpack.c.b16 %v492, %v490
    %v675 = vpack.c.b16 %v495, %v493
    %v676 = vpack.c.b16 %v496, %v494
    %v677 = vpack.c.b16 %v499, %v497
    %v678 = vpack.c.b16 %v500, %v498
    %v679 = vpack.c.b16 %v503, %v501
    %v680 = vpack.c.b16 %v504, %v502
    %v681 = vpack.c.b16 %v507, %v505
    %v682 = vpack.c.b16 %v508, %v506
    %v683 = vpack.c.b16 %v511, %v509
    %v684 = vpack.c.b16 %v512, %v510
    %v685 = vpack.c.b16 %v515, %v513
    %v686 = vpack.c.b16 %v516, %v514
    %v687 = vpack.c.b16 %v519, %v517
    %v688 = vpack.c.b16 %v520, %v518
    %v689 = vpack.c.b16 %v523, %v521
    %v690 = vpack.c.b16 %v524, %v522
    %v691 = vpack.c.b16 %v527, %v525
    %v692 = vpack.c.b16 %v528, %v526
    %v693 = vpack.c.b16 %v531, %v529
    %v694 = vpack.c.b16 %v532, %v530
    %v695 = vpack.c.b16 %v535, %v533
    %v696 = vpack.c.b16 %v536, %v534
    %v697 = vpack.c.b16 %v539, %v537
    %v698 = vpack.c.b16 %v540, %v538
    %v699 = vpack.c.b16 %v543, %v541
    %v700 = vpack.c.b16 %v544, %v542
    %v701 = vpack.c.b16 %v547, %v545
    %v702 = vpack.c.b16 %v548, %v546
    %v703 = vpack.c.b16 %v551, %v549
    %v704 = vpack.c.b16 %v552, %v550
    %v705 = vpack.c.b16 %v555, %v553
    %v706 = vpack.c.b16 %v556, %v554
    %v707 = vpack.c.b16 %v559, %v557
    %v708 = vpack.c.b16 %v560, %v558
    %v709 = vpack.c.b16 %v563, %v561
    %v710 = vpack.c.b16 %v564, %v562
    %v711 = vpack.c.b16 %v567, %v565
    %v712 = vpack.c.b16 %v568, %v566
    %v713 = vpack.c.b16 %v571, %v569
    %v714 = vpack.c.b16 %v572, %v570
    %v715 = vpack.c.b16 %v575, %v573
    %v716 = vpack.c.b16 %v576, %v574
    %v717 = vpack.c.b16 %v579, %v577
    %v718 = vpack.c.b16 %v580, %v578
    %v719 = vpack.c.b16 %v583, %v581
    %v720 = vpack.c.b16 %v584, %v582
    %v721 = vpack.c.b16 %v587, %v585
    %v722 = vpack.c.b16 %v588, %v586
    %v723 = vpack.c.b16 %v591, %v589
    %v724 = vpack.c.b16 %v592, %v590
    %v725 = vpack.c.b16 %v595, %v593
    %v726 = vpack.c.b16 %v596, %v594
    %v727 = vpack.c.b16 %v599, %v597
    %v728 = vpack.c.b16 %v600, %v598
    %v729 = vpack.c.b16 %v603, %v601
    %v730 = vpack.c.b16 %v604, %v602
    %v731 = vpack.c.b16 %v607, %v605
    %v732 = vpack.c.b16 %v608, %v606
    %v733 = vpack.c.b16 %v611, %v609
    %v734 = vpack.c.b16 %v612, %v610
    %v735 = vpack.c.b16 %v615, %v613
    %v736 = vpack.c.b16 %v616, %v614
    %v737 = vpack.c.b16 %v619, %v617
    %v738 = vpack.c.b16 %v620, %v618
    %v739 = vpack.c.b16 %v623, %v621
    %v740 = vpack.c.b16 %v624, %v622
    %v741 = vpack.c.b16 %v627, %v625
    %v742 = vpack.c.b16 %v628, %v626
    %v743 = vpack.c.b16 %v631, %v629
    %v744 = vpack.c.b16 %v632, %v630
    %v745 = vpack.c.b16 %v635, %v633
    %v746 = vpack.c.b16 %v636, %v634
    %v747 = vpack.c.b16 %v639, %v637
    %v748 = vpack.c.b16 %v640, %v638
    %v749 = vpack.c.b16 %v643, %v641
    %v750 = vpack.c.b16 %v644, %v642
    %v751 = vpack.c.b16 %v647, %v645
    %v752 = vpack.c.b16 %v648, %v646
    %v753 = vpack.c.b16 %v651, %v649
    %v754 = vpack.c.b16 %v652, %v650
    %v755 = vpack.c.b16 %v655, %v653
    %v756 = vpack.c.b16 %v656, %v654
    %v757 = vpack.c.b16 %v659, %v657
    %v758 = vpack.c.b16 %v660, %v658
    %v858 = vsel %vm292, %v180, 0
    %860 = vmatprep.subr.bf16.mxu0 %v676
    %861 = vmatpush1.bf16.msra.mxu0 %v675
    %862 = vmatprep.subr.bf16.mxu0 %v674
    %863 = vmatpush1.bf16.msra.mxu0 %v673
    %864 = vmatprep.subr.bf16.mxu0 %v672
    %865 = vmatpush1.bf16.msra.mxu0 %v671
    %866 = vmatprep.subr.bf16.mxu0 %v670
    %867 = vmatpush1.bf16.msra.mxu0 %v669
    %868 = vmatprep.subr.bf16.mxu0 %v668
    %869 = vmatpush1.bf16.msra.mxu0 %v667
    %870 = vmatprep.subr.bf16.mxu0 %v666
    %871 = vmatpush1.bf16.msra.mxu0 %v665
    %872 = vmatprep.subr.bf16.mxu0 %v664
    %873 = vmatpush1.bf16.msra.mxu0 %v663
    %874 = vmatprep.subr.bf16.mxu0 %v662
    %875 = vmatpush1.bf16.msra.mxu0 %v661
    %876 = vmatprep.subr.bf16.mxu0 %v692
    %877 = vmatpush2.bf16.msra.mxu0 %v691
    %878 = vmatprep.subr.bf16.mxu0 %v690
    %879 = vmatpush2.bf16.msra.mxu0 %v689
    %880 = vmatprep.subr.bf16.mxu0 %v688
    %881 = vmatpush2.bf16.msra.mxu0 %v687
    %882 = vmatprep.subr.bf16.mxu0 %v686
    %883 = vmatpush2.bf16.msra.mxu0 %v685
    %884 = vmatprep.subr.bf16.mxu0 %v684
    %885 = vmatpush2.bf16.msra.mxu0 %v683
    %886 = vmatprep.subr.bf16.mxu0 %v682
    %887 = vmatpush2.bf16.msra.mxu0 %v681
    %888 = vmatprep.subr.bf16.mxu0 %v680
    %889 = vmatpush2.bf16.msra.mxu0 %v679
    %890 = vmatprep.subr.bf16.mxu0 %v678
    %891 = vmatpush2.bf16.msra.mxu0 %v677
    %892 = vmatprep.mubr.bf16.mxu0 %v175
    %893 = vmatmul.mubr.bf16.gmra.mxu0 %v174
    %v894 = vpop.f32.mrf.mxu0
    %v895 = vadd.f32 %v363, %v894
    %v896 = vpop.f32.mrf.mxu0
    %v897 = vadd.f32 %v365, %v896
    %v898 = vpop.f32.mrf.mxu0
    %v899 = vpop.f32.mrf.mxu0
    %900 = vdwg.mxu0
    %901 = vmatprep.subr.bf16.mxu0 %v708
    %902 = vmatpush1.bf16.msra.mxu0 %v707
    %903 = vmatprep.subr.bf16.mxu0 %v706
    %904 = vmatpush1.bf16.msra.mxu0 %v705
    %905 = vmatprep.subr.bf16.mxu0 %v704
    %906 = vmatpush1.bf16.msra.mxu0 %v703
    %907 = vmatprep.subr.bf16.mxu0 %v702
    %908 = vmatpush1.bf16.msra.mxu0 %v701
    %909 = vmatprep.subr.bf16.mxu0 %v700
    %910 = vmatpush1.bf16.msra.mxu0 %v699
    %911 = vmatprep.subr.bf16.mxu0 %v698
    %912 = vmatpush1.bf16.msra.mxu0 %v697
    %913 = vmatprep.subr.bf16.mxu0 %v696
    %914 = vmatpush1.bf16.msra.mxu0 %v695
    %915 = vmatprep.subr.bf16.mxu0 %v694
    %916 = vmatpush1.bf16.msra.mxu0 %v693
    %917 = vmatprep.subr.bf16.mxu0 %v724
    %918 = vmatpush2.bf16.msra.mxu0 %v723
    %919 = vmatprep.subr.bf16.mxu0 %v722
    %920 = vmatpush2.bf16.msra.mxu0 %v721
    %921 = vmatprep.subr.bf16.mxu0 %v720
    %922 = vmatpush2.bf16.msra.mxu0 %v719
    %923 = vmatprep.subr.bf16.mxu0 %v718
    %924 = vmatpush2.bf16.msra.mxu0 %v717
    %925 = vmatprep.subr.bf16.mxu0 %v716
    %926 = vmatpush2.bf16.msra.mxu0 %v715
    %927 = vmatprep.subr.bf16.mxu0 %v714
    %928 = vmatpush2.bf16.msra.mxu0 %v713
    %929 = vmatprep.subr.bf16.mxu0 %v712
    %930 = vmatpush2.bf16.msra.mxu0 %v711
    %931 = vmatprep.subr.bf16.mxu0 %v710
    %932 = vmatpush2.bf16.msra.mxu0 %v709
    %933 = vmatprep.mubr.bf16.mxu0 %v177
    %934 = vmatmul.mubr.bf16.gmra.mxu0 %v176
    %v935 = vpop.f32.mrf.mxu0
    %v936 = vadd.f32 %v895, %v935
    %v937 = vpop.f32.mrf.mxu0
    %v938 = vadd.f32 %v897, %v937
    %v939 = vpop.f32.mrf.mxu0
    %v940 = vpop.f32.mrf.mxu0
    %941 = vdwg.mxu0
    %942 = vmatprep.subr.bf16.mxu0 %v740
    %943 = vmatpush1.bf16.msra.mxu0 %v739
    %944 = vmatprep.subr.bf16.mxu0 %v738
    %945 = vmatpush1.bf16.msra.mxu0 %v737
    %946 = vmatprep.subr.bf16.mxu0 %v736
    %947 = vmatpush1.bf16.msra.mxu0 %v735
    %948 = vmatprep.subr.bf16.mxu0 %v734
    %949 = vmatpush1.bf16.msra.mxu0 %v733
    %950 = vmatprep.subr.bf16.mxu0 %v732
    %951 = vmatpush1.bf16.msra.mxu0 %v731
    %952 = vmatprep.subr.bf16.mxu0 %v730
    %953 = vmatpush1.bf16.msra.mxu0 %v729
    %954 = vmatprep.subr.bf16.mxu0 %v728
    %955 = vmatpush1.bf16.msra.mxu0 %v727
    %956 = vmatprep.subr.bf16.mxu0 %v726
    %957 = vmatpush1.bf16.msra.mxu0 %v725
    %958 = vmatprep.subr.bf16.mxu0 %v756
    %959 = vmatpush2.bf16.msra.mxu0 %v755
    %960 = vmatprep.subr.bf16.mxu0 %v754
    %961 = vmatpush2.bf16.msra.mxu0 %v753
    %962 = vmatprep.subr.bf16.mxu0 %v752
    %963 = vmatpush2.bf16.msra.mxu0 %v751
    %964 = vmatprep.subr.bf16.mxu0 %v750
    %965 = vmatpush2.bf16.msra.mxu0 %v749
    %966 = vmatprep.subr.bf16.mxu0 %v748
    %967 = vmatpush2.bf16.msra.mxu0 %v747
    %968 = vmatprep.subr.bf16.mxu0 %v746
    %969 = vmatpush2.bf16.msra.mxu0 %v745
    %970 = vmatprep.subr.bf16.mxu0 %v744
    %971 = vmatpush2.bf16.msra.mxu0 %v743
    %972 = vmatprep.subr.bf16.mxu0 %v742
    %973 = vmatpush2.bf16.msra.mxu0 %v741
    %974 = vmatprep.mubr.bf16.mxu0 %v179
    %975 = vmatmul.mubr.bf16.gmra.mxu0 %v178
    %v976 = vpop.f32.mrf.mxu0
    %v977 = vadd.f32 %v936, %v976
    %v978 = vpop.f32.mrf.mxu0
    %v979 = vadd.f32 %v938, %v978
    %v980 = vpop.f32.mrf.mxu0
    %v981 = vpop.f32.mrf.mxu0
    %982 = vdwg.mxu0
    %983 = vmatprep.subr.bf16.mxu0 0
    %984 = vmatpush1.bf16.msra.mxu0 0
    %985 = vmatprep.subr.bf16.mxu0 0
    %986 = vmatpush1.bf16.msra.mxu0 0
    %987 = vmatprep.subr.bf16.mxu0 0
    %988 = vmatpush1.bf16.msra.mxu0 0
    %989 = vmatprep.subr.bf16.mxu0 0
    %990 = vmatpush1.bf16.msra.mxu0 0
    %991 = vmatprep.subr.bf16.mxu0 0
    %992 = vmatpush1.bf16.msra.mxu0 0
    %993 = vmatprep.subr.bf16.mxu0 0
    %994 = vmatpush1.bf16.msra.mxu0 0
    %995 = vmatprep.subr.bf16.mxu0 0
    %996 = vmatpush1.bf16.msra.mxu0 0
    %997 = vmatprep.subr.bf16.mxu0 %v758
    %998 = vmatpush1.bf16.msra.mxu0 %v757
    %999 = vmatprep.subr.bf16.mxu0 0
    %1000 = vmatpush2.bf16.msra.mxu0 0
    %1001 = vmatprep.subr.bf16.mxu0 0
    %1002 = vmatpush2.bf16.msra.mxu0 0
    %1003 = vmatprep.subr.bf16.mxu0 0
    %1004 = vmatpush2.bf16.msra.mxu0 0
    %1005 = vmatprep.subr.bf16.mxu0 0
    %1006 = vmatpush2.bf16.msra.mxu0 0
    %1007 = vmatprep.subr.bf16.mxu0 0
    %1008 = vmatpush2.bf16.msra.mxu0 0
    %1009 = vmatprep.subr.bf16.mxu0 0
    %1010 = vmatpush2.bf16.msra.mxu0 0
    %1011 = vmatprep.subr.bf16.mxu0 0
    %1012 = vmatpush2.bf16.msra.mxu0 0
    %1013 = vmatprep.subr.bf16.mxu0 0
    %1014 = vmatpush2.bf16.msra.mxu0 0
    %1015 = vmatprep.mubr.bf16.mxu0 0
    %1016 = vmatmul.mubr.bf16.gmra.mxu0 %v858
    %v1017 = vpop.f32.mrf.mxu0
    %v1018 = vadd.f32 %v977, %v1017
    %v1019 = vpop.f32.mrf.mxu0
    %v1020 = vadd.f32 %v979, %v1019
    %v1021 = vpop.f32.mrf.mxu0
    %v1022 = vpop.f32.mrf.mxu0
    %1023 = vdwg.mxu0
    %v1024 = vmax.f32 %v1018, 0.0
    %v1025 = vmax.f32 %v1020, 0.0
    %v1026 = vpack.c.bf16 %v1024, %v1024
    %v1027 = vpack.c.bf16 %v1025, %v1025
    %v1028 = vld [vmem:[#allocation8] sm:$0xf]
    %v1029 = vld [vmem:[#allocation8 + $0x4] sm:$0xf]
    %v1030 = vld [vmem:[#allocation8 + $0x8] sm:$0xf]
    %v1031 = vld [vmem:[#allocation8 + $0xc] sm:$0xf]
    %v1032 = vld [vmem:[#allocation8 + $0x10] sm:$0xf]
    %v1033 = vld [vmem:[#allocation8 + $0x14] sm:$0xf]
    %v1034 = vld [vmem:[#allocation8 + $0x18] sm:$0xf]
    %v1035 = vld [vmem:[#allocation8 + $0x1c] sm:$0xf]
    %v1036 = vld [vmem:[#allocation8 + $0x20] sm:$0xf]
    %v1037 = vld [vmem:[#allocation8 + $0x24] sm:$0xf]
    %v1038 = vld [vmem:[#allocation8 + $0x28] sm:$0xf]
    %v1039 = vld [vmem:[#allocation8 + $0x2c] sm:$0xf]
    %v1040 = vld [vmem:[#allocation8 + $0x30] sm:$0xf]
    %v1041 = vld [vmem:[#allocation8 + $0x34] sm:$0xf]
    %v1042 = vld [vmem:[#allocation8 + $0x38] sm:$0xf]
    %v1043 = vld [vmem:[#allocation8 + $0x3c] sm:$0xf]
    %v1044 = vld [vmem:[#allocation8 + $0x40] sm:$0xf]
    %v1045 = vld [vmem:[#allocation8 + $0x44] sm:$0xf]
    %v1046 = vld [vmem:[#allocation8 + $0x48] sm:$0xf]
    %v1047 = vld [vmem:[#allocation8 + $0x4c] sm:$0xf]
    %v1048 = vld [vmem:[#allocation8 + $0x50] sm:$0xf]
    %v1049 = vld [vmem:[#allocation8 + $0x54] sm:$0xf]
    %v1050 = vld [vmem:[#allocation8 + $0x58] sm:$0xf]
    %v1051 = vld [vmem:[#allocation8 + $0x5c] sm:$0xf]
    %v1052 = vld [vmem:[#allocation8 + $0x60] sm:$0xf]
    %v1053 = vld [vmem:[#allocation8 + $0x64] sm:$0xf]
    %v1054 = vld [vmem:[#allocation8 + $0x68] sm:$0xf]
    %v1055 = vld [vmem:[#allocation8 + $0x6c] sm:$0xf]
    %v1056 = vld [vmem:[#allocation8 + $0x70] sm:$0xf]
    %v1057 = vld [vmem:[#allocation8 + $0x74] sm:$0xf]
    %v1058 = vld [vmem:[#allocation8 + $0x78] sm:$0xf]
    %v1059 = vld [vmem:[#allocation8 + $0x7c] sm:$0xf]
    %v1060 = vld [vmem:[%s5] sm:$0x1]
    %v1062 = vlaneseq
    %v1063 = vshrl.u32 %v1062, 7
    %v1064 = vsub.s32 0, %v1063
    %v1065 = vrot.slane %v1060, %v1064
    %v1099 = vunpack.c.l.b16 %v1028
    %v1100 = vunpack.c.l.b16 %v1029
    %v1101 = vunpack.c.l.b16 %v1030
    %v1102 = vunpack.c.l.b16 %v1031
    %v1103 = vunpack.c.l.b16 %v1032
    %v1104 = vunpack.c.l.b16 %v1033
    %v1105 = vunpack.c.l.b16 %v1034
    %v1106 = vunpack.c.l.b16 %v1035
    %v1107 = vunpack.c.l.b16 %v1036
    %v1108 = vunpack.c.l.b16 %v1037
    %v1109 = vunpack.c.l.b16 %v1038
    %v1110 = vunpack.c.l.b16 %v1039
    %v1111 = vunpack.c.l.b16 %v1040
    %v1112 = vunpack.c.l.b16 %v1041
    %v1113 = vunpack.c.l.b16 %v1042
    %v1114 = vunpack.c.l.b16 %v1043
    %v1115 = vunpack.c.l.b16 %v1044
    %v1116 = vunpack.c.l.b16 %v1045
    %v1117 = vunpack.c.l.b16 %v1046
    %v1118 = vunpack.c.l.b16 %v1047
    %v1119 = vunpack.c.l.b16 %v1048
    %v1120 = vunpack.c.l.b16 %v1049
    %v1121 = vunpack.c.l.b16 %v1050
    %v1122 = vunpack.c.l.b16 %v1051
    %v1123 = vunpack.c.l.b16 %v1052
    %v1124 = vunpack.c.l.b16 %v1053
    %v1125 = vunpack.c.l.b16 %v1054
    %v1126 = vunpack.c.l.b16 %v1055
    %v1127 = vunpack.c.l.b16 %v1056
    %v1128 = vunpack.c.l.b16 %v1057
    %v1129 = vunpack.c.l.b16 %v1058
    %v1130 = vunpack.c.l.b16 %v1059
    %v1131 = vpack.c.b16 %v1100, %v1099
    %v1132 = vpack.c.b16 %v1102, %v1101
    %v1133 = vpack.c.b16 %v1104, %v1103
    %v1134 = vpack.c.b16 %v1106, %v1105
    %v1135 = vpack.c.b16 %v1108, %v1107
    %v1136 = vpack.c.b16 %v1110, %v1109
    %v1137 = vpack.c.b16 %v1112, %v1111
    %v1138 = vpack.c.b16 %v1114, %v1113
    %v1139 = vpack.c.b16 %v1116, %v1115
    %v1140 = vpack.c.b16 %v1118, %v1117
    %v1141 = vpack.c.b16 %v1120, %v1119
    %v1142 = vpack.c.b16 %v1122, %v1121
    %v1143 = vpack.c.b16 %v1124, %v1123
    %v1144 = vpack.c.b16 %v1126, %v1125
    %v1145 = vpack.c.b16 %v1128, %v1127
    %v1146 = vpack.c.b16 %v1130, %v1129
    %1163 = vmatprep.subr.bf16.mxu0 0
    %1164 = vmatpush1.bf16.msra.mxu0 %v1138
    %1165 = vmatprep.subr.bf16.mxu0 0
    %1166 = vmatpush1.bf16.msra.mxu0 %v1137
    %1167 = vmatprep.subr.bf16.mxu0 0
    %1168 = vmatpush1.bf16.msra.mxu0 %v1136
    %1169 = vmatprep.subr.bf16.mxu0 0
    %1170 = vmatpush1.bf16.msra.mxu0 %v1135
    %1171 = vmatprep.subr.bf16.mxu0 0
    %1172 = vmatpush1.bf16.msra.mxu0 %v1134
    %1173 = vmatprep.subr.bf16.mxu0 0
    %1174 = vmatpush1.bf16.msra.mxu0 %v1133
    %1175 = vmatprep.subr.bf16.mxu0 0
    %1176 = vmatpush1.bf16.msra.mxu0 %v1132
    %1177 = vmatprep.subr.bf16.mxu0 0
    %1178 = vmatpush1.bf16.msra.mxu0 %v1131
    %1179 = vmatprep.subr.bf16.mxu0 0
    %1180 = vmatpush2.bf16.msra.mxu0 %v1146
    %1181 = vmatprep.subr.bf16.mxu0 0
    %1182 = vmatpush2.bf16.msra.mxu0 %v1145
    %1183 = vmatprep.subr.bf16.mxu0 0
    %1184 = vmatpush2.bf16.msra.mxu0 %v1144
    %1185 = vmatprep.subr.bf16.mxu0 0
    %1186 = vmatpush2.bf16.msra.mxu0 %v1143
    %1187 = vmatprep.subr.bf16.mxu0 0
    %1188 = vmatpush2.bf16.msra.mxu0 %v1142
    %1189 = vmatprep.subr.bf16.mxu0 0
    %1190 = vmatpush2.bf16.msra.mxu0 %v1141
    %1191 = vmatprep.subr.bf16.mxu0 0
    %1192 = vmatpush2.bf16.msra.mxu0 %v1140
    %1193 = vmatprep.subr.bf16.mxu0 0
    %1194 = vmatpush2.bf16.msra.mxu0 %v1139
    %1195 = vmatprep.mubr.bf16.mxu0 %v1027
    %1196 = vmatmul.mubr.bf16.gmra.mxu0 %v1026
    %v1197 = vpop.f32.mrf.mxu0
    %v1198 = vadd.f32 %v1065, %v1197
    %v1199 = vpop.f32.mrf.mxu0
    %v1200 = vpop.f32.mrf.mxu0
    %v1201 = vpop.f32.mrf.mxu0
    %1202 = vdwg.mxu0
    %1203 = vst [vmem:[#allocation10] sm:$0xff] %v1198
    // Predicated region
    $region42: #{tpu_custom_call.1} parent=1 // pred_check
      _
    $region43: #{tpu_custom_call.1} parent=1 // pred_check_branch
      %1205 = sbr.rel (0) target = $region45
    $region44: #{tpu_custom_call.1} parent=1 // pred_region
      %s1207 = ssub.s32 128, 128
      %1208 = vsyncadd [#allocation4], %s1207
      %s1210 = sshll.u32 [#allocation10], 4
      %s1211 = int_to_ptr.vmem [resolvable:$true] %s1210
      %1213 = dma.vmem_to_hbm [thread:$0]  %s1211, 128, %s6, [#allocation4]
    $region45: #{tpu_custom_call.1} parent=1 // pred_fallthru
      _
    // Predicated region
    $region46: #{tpu_custom_call.1} parent=1 // pred_check
      _
    $region47: #{tpu_custom_call.1} parent=1 // pred_check_branch
      %1215 = sbr.rel (0) target = $region49
    $region48: #{tpu_custom_call.1} parent=1 // pred_region
      %1216 = dma.done [#allocation4], 128
    $region49: #{tpu_custom_call.1} parent=1 // pred_fallthru
      _
    %1217 = vsyncpa [#allocation3], 1
    %1218 = vsyncpa [#allocation6], 1
    %1219 = vsyncpa [#allocation9], 1
    %1220 = vsyncpa [#allocation4], 1

</llo_original>
